<compile_context>
chip_gen: v5e
topology: v5e:2x2
jax: 0.10.0
libtpu: 0.0.40
codegen_flags: <defaults>
</compile_context>

<pallas_src>
import functools

import jax
import jax.numpy as jnp
from jax.experimental import pallas as pl
from jax.experimental.pallas import tpu as pltpu


def _replication_pad1d_kernel(x_ref, o_ref, *, L, pad):
    # x_ref: (TR, L) rows block; o_ref: (TR, L + pad)
    x = x_ref[...]                                   # (TR, L) single dense load
    o_ref[:, :L] = x                                 # bulk copy, no temporary
    last = x[:, L - 1:L]                             # (TR, 1) last column
    o_ref[:, L:L + pad] = jnp.broadcast_to(last, (x.shape[0], pad))


def _choose_row_tile(R, L, Lout, itemsize):
    """Pick a row tile: multiple of 8 (f32 sublane), ~2 MiB per in+out block pair."""
    target_bytes = 2 * 1024 * 1024
    bytes_per_row = max(1, (L + Lout) * itemsize)
    tr = target_bytes // bytes_per_row
    tr = max(8, min(1024, tr))
    tr = (tr // 8) * 8
    r_up8 = ((R + 7) // 8) * 8
    return min(tr, r_up8)


def _replication_pad1d_pallas(x2, L, pad):
    """x2: (R, L) -> (R, L + pad) with right-side replicate padding."""
    R = x2.shape[0]
    Lout = L + pad
    itemsize = jnp.dtype(x2.dtype).itemsize

    tr = _choose_row_tile(R, L, Lout, itemsize)
    r_padded = pl.cdiv(R, tr) * tr
    if r_padded != R:
        # Pad rows so every grid step gets a full (tr, L) block; extra rows are sliced off.
        x2 = jnp.pad(x2, ((0, r_padded - R), (0, 0)))

    kernel = functools.partial(_replication_pad1d_kernel, L=L, pad=pad)

    out2 = pl.pallas_call(
        kernel,
        out_shape=jax.ShapeDtypeStruct((r_padded, Lout), x2.dtype),
        grid=(r_padded // tr,),
        in_specs=[pl.BlockSpec((tr, L), lambda r: (r, 0))],
        out_specs=pl.BlockSpec((tr, Lout), lambda r: (r, 0)),
        compiler_params=pltpu.CompilerParams(
            dimension_semantics=("parallel",),
        ),
        cost_estimate=pl.CostEstimate(
            flops=0,
            transcendentals=0,
            bytes_accessed=int(R * (L + Lout) * itemsize),
        ),
    )(x2)

    if r_padded != R:
        out2 = out2[:R]
    return out2


def replication_pad1d(x: jax.Array, padding, *, use_pallas=None) -> jax.Array:
    """Equivalent of the PyTorch ReplicationPad1d module's forward.

    Only the right-side pad (padding[-1]) is applied, matching the reference
    forward which ignores any left padding value.
    """
    pad = int(padding[-1])
    # TODO(synk): negative pad (cropping, allowed by torch.nn.ReplicationPad1d proper)
    # is not supported; the reference module's .repeat() would reject it anyway.
    assert pad >= 0, "negative padding (cropping) not supported"

    B, C, L = x.shape
    if pad == 0:
        return x

    total_bytes = x.size * jnp.dtype(x.dtype).itemsize
    if use_pallas is None:
        # Kernel launch overhead dominates for tiny tensors; let XLA fuse those.
        use_pallas = total_bytes >= (256 * 1024)
    if not use_pallas:
        return jnp.concatenate(
            [x, jnp.broadcast_to(x[:, :, -1:], (B, C, pad))], axis=-1
        )

    # Collapse (B, C) into one row axis so tiles are large and lane-dense.
    x2 = x.reshape(B * C, L)
    out2 = _replication_pad1d_pallas(x2, L, pad)
    return out2.reshape(B, C, L + pad)


if __name__ == "__main__":
    key = jax.random.PRNGKey(0)
    B, C, L = 2, 4, 16
    padding = (0, 8)  # module stores a padding tuple; forward uses padding[-1]

    x = jax.random.normal(key, (B, C, L), dtype=jnp.float32)

    # Force the Pallas path so the kernel itself is exercised at this small size.
    out = replication_pad1d(x, padding, use_pallas=True)
    out = jax.block_until_ready(out)

    # Reference in plain JAX (mirrors the PyTorch forward exactly).
    ref = jnp.concatenate(
        [x, jnp.repeat(x[:, :, -1:], padding[-1], axis=-1)], axis=-1
    )

    assert out.shape == (B, C, L + padding[-1]), out.shape
    assert out.dtype == x.dtype
    assert jnp.allclose(out, ref), "mismatch vs reference"

    # Also exercise the auto-dispatch wrapper (falls back to XLA at this tiny size).
    out_auto = jax.block_until_ready(replication_pad1d(x, padding))
    assert jnp.allclose(out_auto, ref), "mismatch vs reference (auto path)"

    print("KERNEL_OK")
</pallas_src>

<mosaic_0001>
module attributes {stable_mosaic.version = 11 : i64} {
  func.func @_replication_pad1d_kernel(%arg0: i32, %arg1: memref<8x16xf32, #tpu.memory_space<vmem>>, %arg2: memref<8x24xf32, #tpu.memory_space<vmem>>) attributes {dimension_semantics = [#tpu.dimension_semantics<parallel>], iteration_bounds = array<i64: 1>, scalar_prefetch = 0 : i64, scratch_operands = 0 : i64, tpu.core_type = #tpu.core_type<tc>, window_params = [{transform_indices = @transform_0, window_bounds = array<i64: 8, 16>}, {transform_indices = @transform_1, window_bounds = array<i64: 8, 24>}]} {
    %c0 = arith.constant 0 : index
    %c0_0 = arith.constant 0 : index
    %0 = vector.load %arg1[%c0, %c0_0] : memref<8x16xf32, #tpu.memory_space<vmem>>, vector<8x16xf32>
    %c0_1 = arith.constant 0 : index
    %c0_2 = arith.constant 0 : index
    %1 = vector.load %arg2[%c0_1, %c0_2] : memref<8x24xf32, #tpu.memory_space<vmem>>, vector<8x16xf32>
    tpu.vector_store %arg2[%c0_1, %c0_2], %0 {strides = array<i32>} : memref<8x24xf32, #tpu.memory_space<vmem>>, vector<8x16xf32>,
    %2 = vector.extract_strided_slice %0 {offsets = [0, 15], sizes = [8, 1], strides = [1, 1]} : vector<8x16xf32> to vector<8x1xf32>
    %3 = vector.shape_cast %2 : vector<8x1xf32> to vector<8x1xf32>
    %4 = vector.broadcast %3 : vector<8x1xf32> to vector<8x8xf32>
    %c0_3 = arith.constant 0 : index
    %c16 = arith.constant 16 : index
    %5 = vector.load %arg2[%c0_3, %c16] : memref<8x24xf32, #tpu.memory_space<vmem>>, vector<8x8xf32>
    tpu.vector_store %arg2[%c0_3, %c16], %4 {strides = array<i32>} : memref<8x24xf32, #tpu.memory_space<vmem>>, vector<8x8xf32>,
    return
  }
  func.func @transform_0(%arg0: i32) -> (i32, i32) {
    %c0_i32 = arith.constant 0 : i32
    %c0_i32_0 = arith.constant 0 : i32
    return %arg0, %c0_i32 : i32, i32
  }
  func.func @transform_1(%arg0: i32) -> (i32, i32) {
    %c0_i32 = arith.constant 0 : i32
    %c0_i32_0 = arith.constant 0 : i32
    return %arg0, %c0_i32 : i32, i32
  }
}

</mosaic_0001>

<llo_original>
// kernel: tpu_custom_call.1
$region0: #{tpu_custom_call.1}
  #allocation0 [shape = 'u32[]', space=smem, size = 0x4, offset = 0x4, fixed_abs, tag = 'smem constant byte address 0x4 - core index']
  #allocation1 [shape = 'u32[72,128]{1,0:T(1,128)}', space=vmem, size = 0x9000, scoped, tag = 'internal scratch']
  %s0 = inlined_call_operand.hbm [shape: f32[8,16], index: 0, kind: input, shape index: {}]
  %s1 = inlined_call_operand.hbm [shape: f32[8,24], index: 1, kind: output, shape index: {}]
  %s2 = sld [smem:[#allocation0]]
  $region18: #{tpu_custom_call.1} parent=0
    _
  %s4 = ssub.s32 1, %s2
  %s5 = scalar_select 0, %s4, %s2
  $region1: #{tpu_custom_call.1} parent=0
    #allocation2 [shape = 'u8[4096]{0}', space=vmem, size = 0x1000, scoped, tag = 'input window, operand 0, single buffered']
    #allocation3 [shape = 's32[1]{0}', space=sflag, size = 0x4, scoped, tag = 'scoped memory for tpu_custom_call.1']
    #allocation4 [shape = 's32[1]{0}', space=sflag, size = 0x4, scoped, tag = 'scoped memory for tpu_custom_call.1']
    #allocation5 [shape = 'u8[4096]{0}', space=vmem, size = 0x1000, scoped, tag = 'output window, operand 0, single buffered']
    %6 = vsyncpa [#allocation3], 0
    %7 = vsyncpa [#allocation4], 0
    // Predicated region
    $region2: #{tpu_custom_call.1} parent=1 // pred_check
      _
    $region3: #{tpu_custom_call.1} parent=1 // pred_check_branch
      %9 = sbr.rel (0) target = $region5
    $region4: #{tpu_custom_call.1} parent=1 // pred_region
      %11 = vsyncadd [#allocation3], 0
      %s13 = sshll.u32 %s0, 4
      %s14 = int_to_ptr.hbm [resolvable:$true] %s13
      %s15 = sshll.u32 [#allocation2], 4
      %s16 = int_to_ptr.vmem [resolvable:$true] %s15
      %18 = dma.hbm_to_vmem [thread:$0]  %s14, 128, %s16, [#allocation3]
    $region5: #{tpu_custom_call.1} parent=1 // pred_fallthru
      _
    // Predicated region
    $region6: #{tpu_custom_call.1} parent=1 // pred_check
      _
    $region7: #{tpu_custom_call.1} parent=1 // pred_check_branch
      %20 = sbr.rel (0) target = $region9
    $region8: #{tpu_custom_call.1} parent=1 // pred_region
      %22 = dma.done [#allocation3], 128
    $region9: #{tpu_custom_call.1} parent=1 // pred_fallthru
      _
    %v23 = vld [vmem:[#allocation2] sm:$0xff]
    %vm24 = vcmask 130048
    %25 = vst.msk [vmem:[#allocation5] sm:$0xff] %vm24, %v23
    %27 = vset.pattern.permute.xlu0 15
    %28 = vperm.xlu0 %27, %v23
    %v29 = vpop.permute.xlu0 %28
    %vm31 = vcmask 195712
    %32 = vst.msk [vmem:[#allocation5] sm:$0xff] %vm31, %v29
    // Predicated region
    $region10: #{tpu_custom_call.1} parent=1 // pred_check
      _
    $region11: #{tpu_custom_call.1} parent=1 // pred_check_branch
      %34 = sbr.rel (0) target = $region13
    $region12: #{tpu_custom_call.1} parent=1 // pred_region
      %36 = vsyncadd [#allocation4], 0
      %s38 = sshll.u32 [#allocation5], 4
      %s39 = int_to_ptr.vmem [resolvable:$true] %s38
      %s40 = sshll.u32 %s1, 4
      %s41 = int_to_ptr.hbm [resolvable:$true] %s40
      %43 = dma.vmem_to_hbm [thread:$0]  %s39, 128, %s41, [#allocation4]
    $region13: #{tpu_custom_call.1} parent=1 // pred_fallthru
      _
    // Predicated region
    $region14: #{tpu_custom_call.1} parent=1 // pred_check
      _
    $region15: #{tpu_custom_call.1} parent=1 // pred_check_branch
      %45 = sbr.rel (0) target = $region17
    $region16: #{tpu_custom_call.1} parent=1 // pred_region
      %47 = dma.done [#allocation4], 128
    $region17: #{tpu_custom_call.1} parent=1 // pred_fallthru
      _
    %48 = vsyncpa [#allocation3], 1
    %49 = vsyncpa [#allocation4], 1

</llo_original>
